<compile_context>
chip_gen: v5e
topology: v5e:2x2
jax: 0.10.0
libtpu: 0.0.40
codegen_flags: <defaults>
</compile_context>

<pallas_src>
import functools
import math

import jax
import jax.numpy as jnp
from jax.experimental import pallas as pl
from jax.experimental.pallas import tpu as pltpu


def _cdiv(a, b):
    return -(-a // b)


def _round_up(x, m):
    return _cdiv(x, m) * m


def _vmem_limit_bytes(default=48 << 20):
    # ~3/4 of physical VMEM, always leaving >= 8 MiB headroom for compiler scratch/spills
    # (v5e/v6e: 128 MiB -> 96 MiB, v7x: 64 MiB -> 48 MiB). Fallback sized for the smallest
    # generation (v7x), NOT its full capacity.
    try:
        info = pltpu.get_tpu_info()
        cap = getattr(info, "vmem_capacity_bytes", None)
        if cap:
            return int(min(cap * 3 // 4, cap - (8 << 20)))
    except Exception:
        pass
    return default


def _choose_row_tile(S, max_tile=512):
    # Adaptive row tile: big enough to amortize ~0.35us/grid-step, but sized so the
    # zero-padding waste S_pad - S stays at a few rows instead of up to tile-1.
    n = max(1, _cdiv(S, max_tile))
    tm = _round_up(_cdiv(S, n), 8)
    return max(8, tm)


def _choose_h_chunk(H, max_chunk=512):
    # Chunk the MLP hidden dim: keeps (E,th)/(th,E) weight blocks and the (tm,th)
    # intermediate small (v7x 64 MiB VMEM), and streams weights instead of holding
    # 16*E^2 bytes resident.  Chunks are 128-lane aligned.
    if H <= max_chunk:
        return H, 1, H
    n_h = _cdiv(H, max_chunk)
    th = _round_up(_cdiv(H, n_h), 128)
    n_h = _cdiv(H, th)
    return th, n_h, n_h * th


def _embedding_mlp_kernel(tok_ref, pos_ref, gamma_ref, beta_ref,
                          w1_ref, b1_ref, w2_ref, b2_ref, out_ref,
                          normed_ref, acc_ref, *, approx_gelu):
    # tok_ref: (1, TM, E) f32   pos_ref: (TM, E) f32   w1/w2 chunks: bf16
    h = pl.program_id(2)

    @pl.when(h == 0)
    def _():
        tok = tok_ref[0]                              # (TM, E)
        # LinearEncoding: tokens + positional encodings
        enc = tok + pos_ref[...]
        # LayerNorm over last dim (eps = 1e-5, PyTorch default), f32
        mu = jnp.mean(enc, axis=-1, keepdims=True)
        cen = enc - mu
        var = jnp.mean(cen * cen, axis=-1, keepdims=True)
        normed = cen * jax.lax.rsqrt(var + 1e-5)
        normed = normed * gamma_ref[...] + beta_ref[...]
        normed_ref[...] = normed.astype(jnp.bfloat16)  # MXU lhs, reused for every H chunk
        acc_ref[...] = jnp.zeros_like(acc_ref)

    # MLP chunk: Linear(E->th) -> GELU -> Linear(th->E), f32 accumulation.
    hc = jnp.dot(normed_ref[...], w1_ref[...],
                 preferred_element_type=jnp.float32) + b1_ref[...]
    hc = jax.nn.gelu(hc, approximate=approx_gelu)      # tanh -> EUP slot (default)
    acc_ref[...] += jnp.dot(hc.astype(jnp.bfloat16), w2_ref[...],
                            preferred_element_type=jnp.float32)

    @pl.when(h == pl.num_programs(2) - 1)
    def _():
        # residual: tokens + mlp(norm(encodings(tokens)))
        out_ref[0] = tok_ref[0] + acc_ref[...] + b2_ref[...]


def linear_embedding_forward(x, params, *, tile_rows=512, h_chunk=512, approx_gelu=True):
    """x: (B, S) int32 token ids -> (B, S, E) float32."""
    B, S = x.shape
    emb_table = params["emb_table"]          # (V, E) f32
    pos_table = params["pos_table"]          # (S_max, E) f32
    E = emb_table.shape[1]
    H = params["w1"].shape[1]

    tm = _choose_row_tile(S, tile_rows)
    n_s = _cdiv(S, tm)
    S_pad = n_s * tm

    # Pad the int32 IDs (cheap) rather than the gathered (B,S,E) f32 activations;
    # the gather then emits the padded shape directly.  Padded rows are benign
    # (LayerNorm of any row stays finite) and sliced off afterwards.
    x_p = x if S_pad == S else jnp.pad(x, ((0, 0), (0, S_pad - S)))
    tok_p = emb_table[x_p].astype(jnp.float32)                   # (B, S_pad, E)
    pos_p = jnp.pad(pos_table[:S], ((0, S_pad - S), (0, 0)))     # (S_pad, E) -- no B bcast

    # bf16 weights: half the HBM/VMEM footprint, feeds the MXU at bf16 peak.
    th, n_h, H_pad = _choose_h_chunk(H, h_chunk)
    w1 = params["w1"].astype(jnp.bfloat16)                       # (E, H)
    w2 = params["w2"].astype(jnp.bfloat16)                       # (H, E)
    b1 = params["b1"]                                            # (1, H)
    if H_pad != H:  # zero-pad: padded hidden units contribute exactly 0 to the output
        w1 = jnp.pad(w1, ((0, 0), (0, H_pad - H)))
        b1 = jnp.pad(b1, ((0, 0), (0, H_pad - H)))
        w2 = jnp.pad(w2, ((0, H_pad - H), (0, 0)))

    # batch + H-chunk innermost: tok/pos/gamma/beta/b2 and the output tile keep constant
    # block indices across the inner axes (no re-DMA); w1/w2/b1 chunks stream over h and
    # their double-buffering overlaps DMA with the chunk matmuls.
    grid = (n_s, B, n_h)

    kernel = functools.partial(_embedding_mlp_kernel, approx_gelu=approx_gelu)

    out = pl.pallas_call(
        kernel,
        out_shape=jax.ShapeDtypeStruct((B, S_pad, E), jnp.float32),
        grid_spec=pltpu.PrefetchScalarGridSpec(
            num_scalar_prefetch=0,
            grid=grid,
            in_specs=[
                pl.BlockSpec((1, tm, E), lambda s, b, h: (b, s, 0)),   # tok tile
                pl.BlockSpec((tm, E),    lambda s, b, h: (s, 0)),      # positional slice
                pl.BlockSpec((1, E),     lambda s, b, h: (0, 0)),      # gamma
                pl.BlockSpec((1, E),     lambda s, b, h: (0, 0)),      # beta
                pl.BlockSpec((E, th),    lambda s, b, h: (0, h)),      # w1 chunk (bf16)
                pl.BlockSpec((1, th),    lambda s, b, h: (0, h)),      # b1 chunk
                pl.BlockSpec((th, E),    lambda s, b, h: (h, 0)),      # w2 chunk (bf16)
                pl.BlockSpec((1, E),     lambda s, b, h: (0, 0)),      # b2
            ],
            out_specs=pl.BlockSpec((1, tm, E), lambda s, b, h: (b, s, 0)),
            scratch_shapes=[
                pltpu.VMEM((tm, E), jnp.bfloat16),   # LayerNorm output (MXU lhs)
                pltpu.VMEM((tm, E), jnp.float32),    # MLP output accumulator
            ],
        ),
        compiler_params=pltpu.CompilerParams(
            dimension_semantics=("parallel", "parallel", "arbitrary"),
            vmem_limit_bytes=_vmem_limit_bytes(),
        ),
    )(tok_p, pos_p,
      params["gamma"], params["beta"],
      w1, b1, w2, params["b2"])

    return out if S_pad == S else out[:, :S, :]


def init_params(key, *, vocab_size, embed_dim, max_seq_len, num_layers, ff_mult=4):
    k_emb, k_pos, k_w1, k_w2 = jax.random.split(key, 4)
    E, H = embed_dim, ff_mult * embed_dim
    std_tok = 0.02 / math.sqrt(2 * num_layers)
    params = {
        "emb_table": std_tok * jax.random.normal(k_emb, (vocab_size, E), jnp.float32),
        "pos_table": 0.02 * jax.random.normal(k_pos, (max_seq_len, E), jnp.float32),
        "gamma": jnp.ones((1, E), jnp.float32),
        "beta": jnp.zeros((1, E), jnp.float32),
        "w1": (1.0 / math.sqrt(E)) * jax.random.normal(k_w1, (E, H), jnp.float32),
        "b1": jnp.zeros((1, H), jnp.float32),
        "w2": (1.0 / math.sqrt(H)) * jax.random.normal(k_w2, (H, E), jnp.float32),
        "b2": jnp.zeros((1, E), jnp.float32),
    }
    return params


if __name__ == "__main__":
    # small, lane-dense config: batch=2, seq=8, vocab=64, embed_dim=128, num_layers=4
    B, S, V, E, L = 2, 8, 64, 128, 4
    key = jax.random.PRNGKey(0)
    k_params, k_x = jax.random.split(key)
    params = init_params(k_params, vocab_size=V, embed_dim=E,
                         max_seq_len=S, num_layers=L)
    x = jax.random.randint(k_x, (B, S), 0, V, dtype=jnp.int32)

    out = linear_embedding_forward(x, params)
    jax.block_until_ready(out)
    assert out.shape == (B, S, E) and out.dtype == jnp.float32

    # pure-JAX reference (same bf16 matmul inputs / f32 accumulation / GELU form as kernel)
    tok = params["emb_table"][x]
    enc = tok + params["pos_table"][:S][None]
    mu = enc.mean(-1, keepdims=True)
    var = ((enc - mu) ** 2).mean(-1, keepdims=True)
    normed = (enc - mu) * jax.lax.rsqrt(var + 1e-5) * params["gamma"][0] + params["beta"][0]
    w1b = params["w1"].astype(jnp.bfloat16)
    w2b = params["w2"].astype(jnp.bfloat16)
    h = jnp.dot(normed.astype(jnp.bfloat16), w1b,
                preferred_element_type=jnp.float32) + params["b1"][0]
    h = jax.nn.gelu(h, approximate=True)   # kernel default; pass approx_gelu=False for erf
    y = jnp.dot(h.astype(jnp.bfloat16), w2b,
                preferred_element_type=jnp.float32) + params["b2"][0]
    ref = tok + y
    assert jnp.allclose(out, ref, atol=2e-3, rtol=2e-3), float(jnp.max(jnp.abs(out - ref)))

    print("KERNEL_OK")
</pallas_src>

<mosaic_0001>
module attributes {stable_mosaic.version = 11 : i64} {
  func.func @_embedding_mlp_kernel(%arg0: i32, %arg1: i32, %arg2: i32, %arg3: memref<1x8x128xf32, #tpu.memory_space<vmem>>, %arg4: memref<8x128xf32, #tpu.memory_space<vmem>>, %arg5: memref<1x128xf32, #tpu.memory_space<vmem>>, %arg6: memref<1x128xf32, #tpu.memory_space<vmem>>, %arg7: memref<128x512xbf16, #tpu.memory_space<vmem>>, %arg8: memref<1x512xf32, #tpu.memory_space<vmem>>, %arg9: memref<512x128xbf16, #tpu.memory_space<vmem>>, %arg10: memref<1x128xf32, #tpu.memory_space<vmem>>, %arg11: memref<1x8x128xf32, #tpu.memory_space<vmem>>, %arg12: memref<8x128xbf16, #tpu.memory_space<vmem>>, %arg13: memref<8x128xf32, #tpu.memory_space<vmem>>) attributes {dimension_semantics = [#tpu.dimension_semantics<parallel>, #tpu.dimension_semantics<parallel>, #tpu.dimension_semantics<arbitrary>], iteration_bounds = array<i64: 1, 2, 1>, scalar_prefetch = 0 : i64, scratch_operands = 2 : i64, tpu.core_type = #tpu.core_type<tc>, window_params = [{transform_indices = @transform_0, window_bounds = array<i64: 1, 8, 128>}, {transform_indices = @transform_1, window_bounds = array<i64: 8, 128>}, {pipeline_mode = #tpu.pipeline_mode<synchronous>, transform_indices = @transform_2, window_bounds = array<i64: 1, 128>}, {pipeline_mode = #tpu.pipeline_mode<synchronous>, transform_indices = @transform_3, window_bounds = array<i64: 1, 128>}, {transform_indices = @transform_4, window_bounds = array<i64: 128, 512>}, {transform_indices = @transform_5, window_bounds = array<i64: 1, 512>}, {transform_indices = @transform_6, window_bounds = array<i64: 512, 128>}, {pipeline_mode = #tpu.pipeline_mode<synchronous>, transform_indices = @transform_7, window_bounds = array<i64: 1, 128>}, {transform_indices = @transform_8, window_bounds = array<i64: 1, 8, 128>}]} {
    %c0_i32 = arith.constant 0 : i32
    %0 = arith.cmpi eq, %arg2, %c0_i32 : i32
    %1 = arith.extui %0 : i1 to i32
    %c0_i32_0 = arith.constant 0 : i32
    %2 = arith.cmpi ne, %1, %c0_i32_0 : i32
    scf.if %2 {
      %c0_19 = arith.constant 0 : index
      %c0_20 = arith.constant 0 : index
      %c0_21 = arith.constant 0 : index
      %31 = vector.load %arg3[%c0_19, %c0_20, %c0_21] : memref<1x8x128xf32, #tpu.memory_space<vmem>>, vector<1x8x128xf32>
      %32 = vector.shape_cast %31 : vector<1x8x128xf32> to vector<8x128xf32>
      %c0_22 = arith.constant 0 : index
      %c0_23 = arith.constant 0 : index
      %33 = vector.load %arg4[%c0_22, %c0_23] : memref<8x128xf32, #tpu.memory_space<vmem>>, vector<8x128xf32>
      %34 = arith.addf %32, %33 : vector<8x128xf32>
      %cst_24 = arith.constant dense<0.000000e+00> : vector<8xf32>
      %35 = vector.multi_reduction <add>, %34, %cst_24 [1] : vector<8x128xf32> to vector<8xf32>
      %36 = vector.shape_cast %35 : vector<8xf32> to vector<8x1xf32>
      %cst_25 = arith.constant 1.280000e+02 : f32
      %37 = vector.broadcast %cst_25 : f32 to vector<8x1xf32>
      %38 = arith.divf %36, %37 : vector<8x1xf32>
      %39 = vector.broadcast %38 : vector<8x1xf32> to vector<8x128xf32>
      %40 = arith.subf %34, %39 : vector<8x128xf32>
      %41 = arith.mulf %40, %40 : vector<8x128xf32>
      %cst_26 = arith.constant dense<0.000000e+00> : vector<8xf32>
      %42 = vector.multi_reduction <add>, %41, %cst_26 [1] : vector<8x128xf32> to vector<8xf32>
      %43 = vector.shape_cast %42 : vector<8xf32> to vector<8x1xf32>
      %cst_27 = arith.constant 1.280000e+02 : f32
      %44 = vector.broadcast %cst_27 : f32 to vector<8x1xf32>
      %45 = arith.divf %43, %44 : vector<8x1xf32>
      %cst_28 = arith.constant 9.99999974E-6 : f32
      %46 = vector.broadcast %cst_28 : f32 to vector<8x1xf32>
      %47 = arith.addf %45, %46 : vector<8x1xf32>
      %48 = math.rsqrt %47 : vector<8x1xf32>
      %49 = vector.broadcast %48 : vector<8x1xf32> to vector<8x128xf32>
      %50 = arith.mulf %40, %49 : vector<8x128xf32>
      %c0_29 = arith.constant 0 : index
      %c0_30 = arith.constant 0 : index
      %51 = vector.load %arg5[%c0_29, %c0_30] : memref<1x128xf32, #tpu.memory_space<vmem>>, vector<1x128xf32>
      %52 = vector.broadcast %51 : vector<1x128xf32> to vector<8x128xf32>
      %53 = arith.mulf %50, %52 : vector<8x128xf32>
      %c0_31 = arith.constant 0 : index
      %c0_32 = arith.constant 0 : index
      %54 = vector.load %arg6[%c0_31, %c0_32] : memref<1x128xf32, #tpu.memory_space<vmem>>, vector<1x128xf32>
      %55 = vector.broadcast %54 : vector<1x128xf32> to vector<8x128xf32>
      %56 = arith.addf %53, %55 : vector<8x128xf32>
      %57 = arith.truncf %56 : vector<8x128xf32> to vector<8x128xbf16>
      %c0_33 = arith.constant 0 : index
      %c0_34 = arith.constant 0 : index
      %58 = vector.load %arg12[%c0_33, %c0_34] : memref<8x128xbf16, #tpu.memory_space<vmem>>, vector<8x128xbf16>
      tpu.vector_store %arg12[%c0_33, %c0_34], %57 {strides = array<i32>} : memref<8x128xbf16, #tpu.memory_space<vmem>>, vector<8x128xbf16>,
      %cst_35 = arith.constant 0.000000e+00 : f32
      %59 = vector.broadcast %cst_35 : f32 to vector<8x128xf32>
      %c0_36 = arith.constant 0 : index
      %c0_37 = arith.constant 0 : index
      %60 = vector.load %arg13[%c0_36, %c0_37] : memref<8x128xf32, #tpu.memory_space<vmem>>, vector<8x128xf32>
      tpu.vector_store %arg13[%c0_36, %c0_37], %59 {strides = array<i32>} : memref<8x128xf32, #tpu.memory_space<vmem>>, vector<8x128xf32>,
    } else {
    }
    %c0 = arith.constant 0 : index
    %c0_1 = arith.constant 0 : index
    %3 = vector.load %arg12[%c0, %c0_1] : memref<8x128xbf16, #tpu.memory_space<vmem>>, vector<8x128xbf16>
    %c0_2 = arith.constant 0 : index
    %c0_3 = arith.constant 0 : index
    %4 = vector.load %arg7[%c0_2, %c0_3] : memref<128x512xbf16, #tpu.memory_space<vmem>>, vector<128x512xbf16>
    %cst = arith.constant dense<0.000000e+00> : vector<8x512xf32>
    %5 = tpu.matmul %3, %4, %cst {dimension_numbers = #tpu.dot_dimension_numbers<[1], [0], [0], [1], [0, 0, 1, 1], [], []>} : vector<8x128xbf16>, vector<128x512xbf16>, vector<8x512xf32> -> vector<8x512xf32>
    %c0_4 = arith.constant 0 : index
    %c0_5 = arith.constant 0 : index
    %6 = vector.load %arg8[%c0_4, %c0_5] : memref<1x512xf32, #tpu.memory_space<vmem>>, vector<1x512xf32>
    %7 = vector.broadcast %6 : vector<1x512xf32> to vector<8x512xf32>
    %8 = arith.addf %5, %7 : vector<8x512xf32>
    %9 = arith.mulf %8, %8 : vector<8x512xf32>
    %10 = arith.mulf %8, %9 : vector<8x512xf32>
    %cst_6 = arith.constant 4.471500e-02 : f32
    %11 = vector.broadcast %cst_6 : f32 to vector<8x512xf32>
    %12 = arith.mulf %11, %10 : vector<8x512xf32>
    %13 = arith.addf %8, %12 : vector<8x512xf32>
    %cst_7 = arith.constant 0.797884583 : f32
    %14 = vector.broadcast %cst_7 : f32 to vector<8x512xf32>
    %15 = arith.mulf %14, %13 : vector<8x512xf32>
    %16 = math.tanh %15 : vector<8x512xf32>
    %cst_8 = arith.constant 1.000000e+00 : f32
    %17 = vector.broadcast %cst_8 : f32 to vector<8x512xf32>
    %18 = arith.addf %17, %16 : vector<8x512xf32>
    %cst_9 = arith.constant 5.000000e-01 : f32
    %19 = vector.broadcast %cst_9 : f32 to vector<8x512xf32>
    %20 = arith.mulf %19, %18 : vector<8x512xf32>
    %21 = arith.mulf %8, %20 : vector<8x512xf32>
    %c0_10 = arith.constant 0 : index
    %c0_11 = arith.constant 0 : index
    %22 = vector.load %arg13[%c0_10, %c0_11] : memref<8x128xf32, #tpu.memory_space<vmem>>, vector<8x128xf32>
    %23 = arith.truncf %21 : vector<8x512xf32> to vector<8x512xbf16>
    %c0_12 = arith.constant 0 : index
    %c0_13 = arith.constant 0 : index
    %24 = vector.load %arg9[%c0_12, %c0_13] : memref<512x128xbf16, #tpu.memory_space<vmem>>, vector<512x128xbf16>
    %cst_14 = arith.constant dense<0.000000e+00> : vector<8x128xf32>
    %25 = tpu.matmul %23, %24, %cst_14 {dimension_numbers = #tpu.dot_dimension_numbers<[1], [0], [0], [1], [0, 0, 1, 1], [], []>} : vector<8x512xbf16>, vector<512x128xbf16>, vector<8x128xf32> -> vector<8x128xf32>
    %26 = arith.addf %22, %25 : vector<8x128xf32>
    %c0_15 = arith.constant 0 : index
    %c0_16 = arith.constant 0 : index
    %27 = vector.load %arg13[%c0_15, %c0_16] : memref<8x128xf32, #tpu.memory_space<vmem>>, vector<8x128xf32>
    tpu.vector_store %arg13[%c0_15, %c0_16], %26 {strides = array<i32>} : memref<8x128xf32, #tpu.memory_space<vmem>>, vector<8x128xf32>,
    %c0_i32_17 = arith.constant 0 : i32
    %28 = arith.cmpi eq, %arg2, %c0_i32_17 : i32
    %29 = arith.extui %28 : i1 to i32
    %c0_i32_18 = arith.constant 0 : i32
    %30 = arith.cmpi ne, %29, %c0_i32_18 : i32
    scf.if %30 {
      %c0_19 = arith.constant 0 : index
      %c0_20 = arith.constant 0 : index
      %c0_21 = arith.constant 0 : index
      %31 = vector.load %arg3[%c0_19, %c0_20, %c0_21] : memref<1x8x128xf32, #tpu.memory_space<vmem>>, vector<1x8x128xf32>
      %32 = vector.shape_cast %31 : vector<1x8x128xf32> to vector<8x128xf32>
      %c0_22 = arith.constant 0 : index
      %c0_23 = arith.constant 0 : index
      %33 = vector.load %arg13[%c0_22, %c0_23] : memref<8x128xf32, #tpu.memory_space<vmem>>, vector<8x128xf32>
      %34 = arith.addf %32, %33 : vector<8x128xf32>
      %c0_24 = arith.constant 0 : index
      %c0_25 = arith.constant 0 : index
      %35 = vector.load %arg10[%c0_24, %c0_25] : memref<1x128xf32, #tpu.memory_space<vmem>>, vector<1x128xf32>
      %36 = vector.broadcast %35 : vector<1x128xf32> to vector<8x128xf32>
      %37 = arith.addf %34, %36 : vector<8x128xf32>
      %c0_26 = arith.constant 0 : index
      %c0_27 = arith.constant 0 : index
      %c0_28 = arith.constant 0 : index
      %38 = vector.load %arg11[%c0_26, %c0_27, %c0_28] : memref<1x8x128xf32, #tpu.memory_space<vmem>>, vector<1x8x128xf32>
      %39 = vector.shape_cast %38 : vector<1x8x128xf32> to vector<8x128xf32>
      %40 = vector.shape_cast %37 : vector<8x128xf32> to vector<1x8x128xf32>
      tpu.vector_store %arg11[%c0_26, %c0_27, %c0_28], %40 {strides = array<i32>} : memref<1x8x128xf32, #tpu.memory_space<vmem>>, vector<1x8x128xf32>,
    } else {
    }
    return
  }
  func.func @transform_0(%arg0: i32, %arg1: i32, %arg2: i32) -> (i32, i32, i32) {
    %c0_i32 = arith.constant 0 : i32
    %c0_i32_0 = arith.constant 0 : i32
    return %arg1, %arg0, %c0_i32 : i32, i32, i32
  }
  func.func @transform_1(%arg0: i32, %arg1: i32, %arg2: i32) -> (i32, i32) {
    %c0_i32 = arith.constant 0 : i32
    %c0_i32_0 = arith.constant 0 : i32
    return %arg0, %c0_i32 : i32, i32
  }
  func.func @transform_2(%arg0: i32, %arg1: i32, %arg2: i32) -> (i32, i32) {
    %c0_i32 = arith.constant 0 : i32
    %c0_i32_0 = arith.constant 0 : i32
    %c0_i32_1 = arith.constant 0 : i32
    return %c0_i32, %c0_i32_0 : i32, i32
  }
  func.func @transform_3(%arg0: i32, %arg1: i32, %arg2: i32) -> (i32, i32) {
    %c0_i32 = arith.constant 0 : i32
    %c0_i32_0 = arith.constant 0 : i32
    %c0_i32_1 = arith.constant 0 : i32
    return %c0_i32, %c0_i32_0 : i32, i32
  }
  func.func @transform_4(%arg0: i32, %arg1: i32, %arg2: i32) -> (i32, i32) {
    %c0_i32 = arith.constant 0 : i32
    %c0_i32_0 = arith.constant 0 : i32
    return %c0_i32, %arg2 : i32, i32
  }
  func.func @transform_5(%arg0: i32, %arg1: i32, %arg2: i32) -> (i32, i32) {
    %c0_i32 = arith.constant 0 : i32
    %c0_i32_0 = arith.constant 0 : i32
    return %c0_i32, %arg2 : i32, i32
  }
  func.func @transform_6(%arg0: i32, %arg1: i32, %arg2: i32) -> (i32, i32) {
    %c0_i32 = arith.constant 0 : i32
    %c0_i32_0 = arith.constant 0 : i32
    return %arg2, %c0_i32 : i32, i32
  }
  func.func @transform_7(%arg0: i32, %arg1: i32, %arg2: i32) -> (i32, i32) {
    %c0_i32 = arith.constant 0 : i32
    %c0_i32_0 = arith.constant 0 : i32
    %c0_i32_1 = arith.constant 0 : i32
    return %c0_i32, %c0_i32_0 : i32, i32
  }
  func.func @transform_8(%arg0: i32, %arg1: i32, %arg2: i32) -> (i32, i32, i32) {
    %c0_i32 = arith.constant 0 : i32
    %c0_i32_0 = arith.constant 0 : i32
    return %arg1, %arg0, %c0_i32 : i32, i32, i32
  }
}

</mosaic_0001>

<llo_original>
// kernel: tpu_custom_call.1
$region0: #{tpu_custom_call.1}
  #allocation0 [shape = 'u32[]', space=smem, size = 0x4, offset = 0x4, fixed_abs, tag = 'smem constant byte address 0x4 - core index']
  #allocation1 [shape = 'u32[72,128]{1,0:T(1,128)}', space=vmem, size = 0x9000, scoped, tag = 'internal scratch']
  #allocation2 [shape = 'bf16[8,128]{1,0:T(8,128)(2,1)}', space=vmem, size = 0x800, scoped, tag = 'scratch operand']
  #allocation3 [shape = 'f32[8,128]{1,0:T(8,128)}', space=vmem, size = 0x1000, scoped, tag = 'scratch operand']
  %s0 = inlined_call_operand.hbm [shape: f32[2,8,128], index: 0, kind: input, shape index: {}]
  %s1 = inlined_call_operand.hbm [shape: f32[8,128], index: 1, kind: input, shape index: {}]
  %s2 = inlined_call_operand.hbm [shape: f32[1,128], index: 2, kind: input, shape index: {}]
  %s3 = inlined_call_operand.hbm [shape: f32[1,128], index: 3, kind: input, shape index: {}]
  %s4 = inlined_call_operand.hbm [shape: bf16[128,512], index: 4, kind: input, shape index: {}]
  %s5 = inlined_call_operand.vmem [shape: f32[1,512], index: 5, kind: input, shape index: {}]
  %s6 = inlined_call_operand.hbm [shape: bf16[512,128], index: 6, kind: input, shape index: {}]
  %s7 = inlined_call_operand.vmem [shape: f32[1,128], index: 7, kind: input, shape index: {}]
  %s8 = inlined_call_operand.hbm [shape: f32[2,8,128], index: 8, kind: output, shape index: {}]
  %s9 = sld [smem:[#allocation0]]
  $region97: #{tpu_custom_call.1} parent=0
    _
  %s11 = ssub.s32 1, %s9
  %s12 = scalar_select 0, %s11, %s9
  $region1: #{tpu_custom_call.1} parent=0
    #allocation4 [shape = 'u8[8192]{0}', space=vmem, size = 0x2000, scoped, tag = 'input window, operand 0']
    #allocation5 [shape = 's32[2]{0}', space=sflag, size = 0x8, scoped, tag = 'scoped memory for tpu_custom_call.1']
    #allocation6 [shape = 's32[2]{0}', space=sflag, size = 0x8, scoped, tag = 'scoped memory for tpu_custom_call.1']
    #allocation7 [shape = 'u8[4096]{0}', space=vmem, size = 0x1000, scoped, tag = 'input window, operand 1, single buffered']
    #allocation8 [shape = 's32[1]{0}', space=sflag, size = 0x4, scoped, tag = 'scoped memory for tpu_custom_call.1']
    #allocation9 [shape = 'u8[512]{0}', space=vmem, size = 0x400, scoped, tag = 'input window, operand 2, single buffered']
    #allocation10 [shape = 'u8[512]{0}', space=vmem, size = 0x400, scoped, tag = 'input window, operand 3, single buffered']
    #allocation11 [shape = 's32[1]{0}', space=sflag, size = 0x4, scoped, tag = 'scoped memory for tpu_custom_call.1']
    #allocation12 [shape = 'u8[131072]{0}', space=vmem, size = 0x20000, scoped, tag = 'input window, operand 4, single buffered']
    #allocation13 [shape = 'u8[131072]{0}', space=vmem, size = 0x20000, scoped, tag = 'input window, operand 6, single buffered']
    #allocation14 [shape = 's32[1]{0}', space=sflag, size = 0x4, scoped, tag = 'scoped memory for tpu_custom_call.1']
    #allocation15 [shape = 'u8[8192]{0}', space=vmem, size = 0x2000, scoped, tag = 'output window, operand 0']
    %13 = vsyncpa [#allocation5], 0
    %s14 = scalar_lea.sflag [#allocation5], 1
    %15 = vsyncpa %s14, 0
    %16 = vsyncpa [#allocation8], 0
    %17 = vsyncpa [#allocation11], 0
    %18 = vsyncpa [#allocation14], 0
    %19 = vsyncpa [#allocation6], 0
    %s20 = scalar_lea.sflag [#allocation6], 1
    %21 = vsyncpa %s20, 0
    loop: start=0, step=1, limit=4
    $region2: #{tpu_custom_call.1} parent=1 // loop_pre_header
      _
    $region3: #{tpu_custom_call.1} parent=1 // loop_header
      %s23 = sphi 0, %s27
      %p24 = scmp.ge.s32.totalorder %s23, 4
      %s30 = sphi 0, %s49
      %s31 = sphi 0, %s45
      %s32 = sphi 0, %s41
      %s33 = sphi 0, %s30
      %s34 = sphi 0, %s31
      %s35 = sphi 0, %s32
      %s36 = sphi 0, %s33
      %s37 = sphi 0, %s34
      %s38 = sphi 0, %s35
      %s54 = sphi 0, %s56
      %s57 = sphi 0, %s54
      %s58 = sphi 0, %s57
      %s74 = sphi 0, %s58
      %s80 = sphi 0, %s82
      %s83 = sphi 0, %s80
      %s84 = sphi 0, %s83
      %s100 = sphi 0, %s84
      %s104 = sphi 0, %s104
      %s106 = sphi 0, %s104
      %s107 = sphi 0, %s106
      %s121 = sphi 0, %s107
      %s125 = sphi 0, %s125
      %s127 = sphi 0, %s125
      %s128 = sphi 0, %s127
      %s142 = sphi 0, %s128
      %s148 = sphi 0, %s150
      %s151 = sphi 0, %s148
      %s152 = sphi 0, %s151
      %s168 = sphi 0, %s152
      %s174 = sphi 0, %s176
      %s177 = sphi 0, %s174
      %s178 = sphi 0, %s177
      %s194 = sphi 0, %s178
      %s200 = sphi 0, %s202
      %s203 = sphi 0, %s200
      %s204 = sphi 0, %s203
      %s220 = sphi 0, %s204
      %s224 = sphi 0, %s224
      %s226 = sphi 0, %s224
      %s227 = sphi 0, %s226
      %s241 = sphi 0, %s227
      %s249 = sphi 0, %s251
      %s252 = sphi 0, %s249
      %s253 = sphi 0, %s252
      %s269 = sphi 0, %s253
    $region4: #{tpu_custom_call.1} parent=1 // loop_header_branch
      %26 = sbr.rel (%p24) target = $region8
    $region5: #{tpu_custom_call.1} parent=1 // loop_body
      %s28 = ssub.s32 %s23, 1
      %s29 = ssub.s32 %s23, 2
      %s39 = sadd.s32 1, %s32
      %p40 = scmp.ge.s32.totalorder %s39, 1
      %s41 = scalar_select %p40, 0, %s39
      %s42 = sadd.s32 1, %s31
      %s43 = scalar_select %p40, %s42, %s31
      %p44 = scmp.ge.s32.totalorder %s43, 2
      %s45 = scalar_select %p44, 0, %s43
      %s46 = sadd.s32 1, %s30
      %s47 = scalar_select %p44, %s46, %s30
      %p48 = scmp.ge.s32.totalorder %s47, 1
      %s49 = scalar_select %p48, 0, %s47
      %s50 = ssub.s32 %s31, %s45
      %s51 = ssub.s32 %s30, %s49
      %s52 = sor.u32 %s50, %s51
      %p53 = scmp.eq.s32.totalorder %s52, 0
      %s55 = sadd.s32 %s54, 1
      %s56 = scalar_select %p53, %s54, %s55
      %p59 = pneg %p53
      %p60 = scmp.eq.s32.totalorder %s23, 1
      %p61 = por %p59, %p60
      %p62 = scmp.ne.s32.totalorder %s54, %s57
      %p63 = scmp.eq.s32.totalorder %s23, 0
      %p64 = por %p62, %p63
      %p65 = scmp.ne.s32.totalorder %s54, %s57
      %p66 = scmp.eq.s32.totalorder %s28, 1
      %p67 = por %p65, %p66
      %p68 = scmp.ne.s32.totalorder %s57, %s58
      %p69 = scmp.eq.s32.totalorder %s28, 0
      %p70 = por %p68, %p69
      %p71 = scmp.ne.s32.totalorder %s57, %s58
      %p72 = scmp.eq.s32.totalorder %s29, 1
      %p73 = por %p71, %p72
      %p75 = scmp.ne.s32.totalorder %s58, %s74
      %p76 = scmp.eq.s32.totalorder %s29, 0
      %p77 = por %p75, %p76
      %s78 = ssub.s32 %s30, %s49
      %p79 = scmp.eq.s32.totalorder %s78, 0
      %s81 = sadd.s32 %s80, 1
      %s82 = scalar_select %p79, %s80, %s81
      %p85 = pneg %p79
      %p86 = scmp.eq.s32.totalorder %s23, 1
      %p87 = por %p85, %p86
      %p88 = scmp.ne.s32.totalorder %s80, %s83
      %p89 = scmp.eq.s32.totalorder %s23, 0
      %p90 = por %p88, %p89
      %p91 = scmp.ne.s32.totalorder %s80, %s83
      %p92 = scmp.eq.s32.totalorder %s28, 1
      %p93 = por %p91, %p92
      %p94 = scmp.ne.s32.totalorder %s83, %s84
      %p95 = scmp.eq.s32.totalorder %s28, 0
      %p96 = por %p94, %p95
      %p97 = scmp.ne.s32.totalorder %s83, %s84
      %p98 = scmp.eq.s32.totalorder %s29, 1
      %p99 = por %p97, %p98
      %p101 = scmp.ne.s32.totalorder %s84, %s100
      %p102 = scmp.eq.s32.totalorder %s29, 0
      %p103 = por %p101, %p102
      %s105 = sadd.s32 %s104, 1
      %p108 = scmp.eq.s32.totalorder %s23, 1
      %p109 = scmp.ne.s32.totalorder %s104, %s106
      %p110 = scmp.eq.s32.totalorder %s23, 0
      %p111 = por %p109, %p110
      %p112 = scmp.ne.s32.totalorder %s104, %s106
      %p113 = scmp.eq.s32.totalorder %s28, 1
      %p114 = por %p112, %p113
      %p115 = scmp.ne.s32.totalorder %s106, %s107
      %p116 = scmp.eq.s32.totalorder %s28, 0
      %p117 = por %p115, %p116
      %p118 = scmp.ne.s32.totalorder %s106, %s107
      %p119 = scmp.eq.s32.totalorder %s29, 1
      %p120 = por %p118, %p119
      %p122 = scmp.ne.s32.totalorder %s107, %s121
      %p123 = scmp.eq.s32.totalorder %s29, 0
      %p124 = por %p122, %p123
      %s126 = sadd.s32 %s125, 1
      %p129 = scmp.eq.s32.totalorder %s23, 1
      %p130 = scmp.ne.s32.totalorder %s125, %s127
      %p131 = scmp.eq.s32.totalorder %s23, 0
      %p132 = por %p130, %p131
      %p133 = scmp.ne.s32.totalorder %s125, %s127
      %p134 = scmp.eq.s32.totalorder %s28, 1
      %p135 = por %p133, %p134
      %p136 = scmp.ne.s32.totalorder %s127, %s128
      %p137 = scmp.eq.s32.totalorder %s28, 0
      %p138 = por %p136, %p137
      %p139 = scmp.ne.s32.totalorder %s127, %s128
      %p140 = scmp.eq.s32.totalorder %s29, 1
      %p141 = por %p139, %p140
      %p143 = scmp.ne.s32.totalorder %s128, %s142
      %p144 = scmp.eq.s32.totalorder %s29, 0
      %p145 = por %p143, %p144
      %s146 = ssub.s32 %s32, %s41
      %p147 = scmp.eq.s32.totalorder %s146, 0
      %s149 = sadd.s32 %s148, 1
      %s150 = scalar_select %p147, %s148, %s149
      %p153 = pneg %p147
      %p154 = scmp.eq.s32.totalorder %s23, 1
      %p155 = por %p153, %p154
      %p156 = scmp.ne.s32.totalorder %s148, %s151
      %p157 = scmp.eq.s32.totalorder %s23, 0
      %p158 = por %p156, %p157
      %p159 = scmp.ne.s32.totalorder %s148, %s151
      %p160 = scmp.eq.s32.totalorder %s28, 1
      %p161 = por %p159, %p160
      %p162 = scmp.ne.s32.totalorder %s151, %s152
      %p163 = scmp.eq.s32.totalorder %s28, 0
      %p164 = por %p162, %p163
      %p165 = scmp.ne.s32.totalorder %s151, %s152
      %p166 = scmp.eq.s32.totalorder %s29, 1
      %p167 = por %p165, %p166
      %p169 = scmp.ne.s32.totalorder %s152, %s168
      %p170 = scmp.eq.s32.totalorder %s29, 0
      %p171 = por %p169, %p170
      %s172 = ssub.s32 %s32, %s41
      %p173 = scmp.eq.s32.totalorder %s172, 0
      %s175 = sadd.s32 %s174, 1
      %s176 = scalar_select %p173, %s174, %s175
      %p179 = pneg %p173
      %p180 = scmp.eq.s32.totalorder %s23, 1
      %p181 = por %p179, %p180
      %p182 = scmp.ne.s32.totalorder %s174, %s177
      %p183 = scmp.eq.s32.totalorder %s23, 0
      %p184 = por %p182, %p183
      %p185 = scmp.ne.s32.totalorder %s174, %s177
      %p186 = scmp.eq.s32.totalorder %s28, 1
      %p187 = por %p185, %p186
      %p188 = scmp.ne.s32.totalorder %s177, %s178
      %p189 = scmp.eq.s32.totalorder %s28, 0
      %p190 = por %p188, %p189
      %p191 = scmp.ne.s32.totalorder %s177, %s178
      %p192 = scmp.eq.s32.totalorder %s29, 1
      %p193 = por %p191, %p192
      %p195 = scmp.ne.s32.totalorder %s178, %s194
      %p196 = scmp.eq.s32.totalorder %s29, 0
      %p197 = por %p195, %p196
      %s198 = ssub.s32 %s32, %s41
      %p199 = scmp.eq.s32.totalorder %s198, 0
      %s201 = sadd.s32 %s200, 1
      %s202 = scalar_select %p199, %s200, %s201
      %p205 = pneg %p199
      %p206 = scmp.eq.s32.totalorder %s23, 1
      %p207 = por %p205, %p206
      %p208 = scmp.ne.s32.totalorder %s200, %s203
      %p209 = scmp.eq.s32.totalorder %s23, 0
      %p210 = por %p208, %p209
      %p211 = scmp.ne.s32.totalorder %s200, %s203
      %p212 = scmp.eq.s32.totalorder %s28, 1
      %p213 = por %p211, %p212
      %p214 = scmp.ne.s32.totalorder %s203, %s204
      %p215 = scmp.eq.s32.totalorder %s28, 0
      %p216 = por %p214, %p215
      %p217 = scmp.ne.s32.totalorder %s203, %s204
      %p218 = scmp.eq.s32.totalorder %s29, 1
      %p219 = por %p217, %p218
      %p221 = scmp.ne.s32.totalorder %s204, %s220
      %p222 = scmp.eq.s32.totalorder %s29, 0
      %p223 = por %p221, %p222
      %s225 = sadd.s32 %s224, 1
      %p228 = scmp.eq.s32.totalorder %s23, 1
      %p229 = scmp.ne.s32.totalorder %s224, %s226
      %p230 = scmp.eq.s32.totalorder %s23, 0
      %p231 = por %p229, %p230
      %p232 = scmp.ne.s32.totalorder %s224, %s226
      %p233 = scmp.eq.s32.totalorder %s28, 1
      %p234 = por %p232, %p233
      %p235 = scmp.ne.s32.totalorder %s226, %s227
      %p236 = scmp.eq.s32.totalorder %s28, 0
      %p237 = por %p235, %p236
      %p238 = scmp.ne.s32.totalorder %s226, %s227
      %p239 = scmp.eq.s32.totalorder %s29, 1
      %p240 = por %p238, %p239
      %p242 = scmp.ne.s32.totalorder %s227, %s241
      %p243 = scmp.eq.s32.totalorder %s29, 0
      %p244 = por %p242, %p243
      %s245 = ssub.s32 %s31, %s45
      %s246 = ssub.s32 %s30, %s49
      %s247 = sor.u32 %s245, %s246
      %p248 = scmp.eq.s32.totalorder %s247, 0
      %s250 = sadd.s32 %s249, 1
      %s251 = scalar_select %p248, %s249, %s250
      %p254 = pneg %p248
      %p255 = scmp.eq.s32.totalorder %s23, 1
      %p256 = por %p254, %p255
      %p257 = scmp.ne.s32.totalorder %s249, %s252
      %p258 = scmp.eq.s32.totalorder %s23, 0
      %p259 = por %p257, %p258
      %p260 = scmp.ne.s32.totalorder %s249, %s252
      %p261 = scmp.eq.s32.totalorder %s28, 1
      %p262 = por %p260, %p261
      %p263 = scmp.ne.s32.totalorder %s252, %s253
      %p264 = scmp.eq.s32.totalorder %s28, 0
      %p265 = por %p263, %p264
      %p266 = scmp.ne.s32.totalorder %s252, %s253
      %p267 = scmp.eq.s32.totalorder %s29, 1
      %p268 = por %p266, %p267
      %p270 = scmp.ne.s32.totalorder %s253, %s269
      %p271 = scmp.eq.s32.totalorder %s29, 0
      %p272 = por %p270, %p271
      %p273 = scmp.le.s32.totalorder 1, %s23
      %p274 = scmp.lt.s32.totalorder %s23, 3
      %p275 = pnand %p273, %p274
      %p276 = pneg %p275
      // Predicated region
      $region9: #{tpu_custom_call.1} parent=5 // pred_check
        _
      $region10: #{tpu_custom_call.1} parent=5 // pred_check_branch
        %278 = sbr.rel (%p275) target = $region12
      $region11: #{tpu_custom_call.1} parent=5 // pred_region
        %s279 = ssub.s32 %s23, 1
        // Predicated region
        $region13: #{tpu_custom_call.1} parent=11 // pred_check
          %p280 = pneg %p96
        $region14: #{tpu_custom_call.1} parent=11 // pred_check_branch
          %282 = sbr.rel (%p280) target = $region16
        $region15: #{tpu_custom_call.1} parent=11 // pred_region
          %284 = vsyncadd [#allocation8], 0
          %s285 = smul.addr %s33, 8
          %s286 = scalar_lea.hbm %s1, %s285
          %s288 = sshll.u32 %s286, 4
          %s289 = int_to_ptr.hbm [resolvable:$true] %s288
          %s290 = sshll.u32 [#allocation7], 4
          %s291 = int_to_ptr.vmem [resolvable:$true] %s290
          %293 = dma.hbm_to_vmem [thread:$0]  %s289, 128, %s291, [#allocation8]
        $region16: #{tpu_custom_call.1} parent=11 // pred_fallthru
          _
        // Predicated region
        $region17: #{tpu_custom_call.1} parent=11 // pred_check
          %p294 = pneg %p117
        $region18: #{tpu_custom_call.1} parent=11 // pred_check_branch
          %296 = sbr.rel (%p294) target = $region20
        $region19: #{tpu_custom_call.1} parent=11 // pred_region
          %298 = vsyncadd [#allocation8], 0
          %s300 = sshll.u32 %s2, 4
          %s301 = int_to_ptr.hbm [resolvable:$true] %s300
          %s302 = sshll.u32 [#allocation9], 4
          %s303 = int_to_ptr.vmem [resolvable:$true] %s302
          %305 = dma.hbm_to_vmem [thread:$0]  %s301, 16, %s303, [#allocation8]
        $region20: #{tpu_custom_call.1} parent=11 // pred_fallthru
          _
        // Predicated region
        $region21: #{tpu_custom_call.1} parent=11 // pred_check
          %p306 = pneg %p138
        $region22: #{tpu_custom_call.1} parent=11 // pred_check_branch
          %308 = sbr.rel (%p306) target = $region24
        $region23: #{tpu_custom_call.1} parent=11 // pred_region
          %310 = vsyncadd [#allocation11], 0
          %s312 = sshll.u32 %s3, 4
          %s313 = int_to_ptr.hbm [resolvable:$true] %s312
          %s314 = sshll.u32 [#allocation10], 4
          %s315 = int_to_ptr.vmem [resolvable:$true] %s314
          %317 = dma.hbm_to_vmem [thread:$0]  %s313, 16, %s315, [#allocation11]
        $region24: #{tpu_custom_call.1} parent=11 // pred_fallthru
          _
        // Predicated region
        $region25: #{tpu_custom_call.1} parent=11 // pred_check
          %p318 = pneg %p164
        $region26: #{tpu_custom_call.1} parent=11 // pred_check_branch
          %320 = sbr.rel (%p318) target = $region28
        $region27: #{tpu_custom_call.1} parent=11 // pred_region
          %s321 = smul.u32 4, %s35
          %323 = vsyncadd [#allocation11], 0
          %s324 = smul.addr %s321, 4
          %s325 = scalar_lea.hbm %s4, %s324
          %s326 = sshll.u32 %s325, 4
          %s327 = int_to_ptr.hbm [resolvable:$true] %s326
          %s328 = sshll.u32 [#allocation12], 4
          %s329 = int_to_ptr.vmem [resolvable:$true] %s328
          %334 = dma.hbm_to_vmem [thread:$0]  %s327, 4096, %s329, [#allocation11], 256, 256, 16
        $region28: #{tpu_custom_call.1} parent=11 // pred_fallthru
          _
        // Predicated region
        $region29: #{tpu_custom_call.1} parent=11 // pred_check
          %p335 = pneg %p190
        $region30: #{tpu_custom_call.1} parent=11 // pred_check_branch
          %337 = sbr.rel (%p335) target = $region32
        $region31: #{tpu_custom_call.1} parent=11 // pred_region
          %s338 = smul.u32 4, %s35
          %p339 = scmp.lt.s32.totalorder %s338, 3
          %s340 = scalar_select %p339, %s338, 3
          %s341 = scalar_lea.vmem %s5, %s340
          %s342 = smul.u32 4, %s35
        $region32: #{tpu_custom_call.1} parent=11 // pred_fallthru
          _
        // Predicated region
        $region33: #{tpu_custom_call.1} parent=11 // pred_check
          %p343 = pneg %p216
        $region34: #{tpu_custom_call.1} parent=11 // pred_check_branch
          %345 = sbr.rel (%p343) target = $region36
        $region35: #{tpu_custom_call.1} parent=11 // pred_region
          %s346 = smul.u32 64, %s35
          %348 = vsyncadd [#allocation14], 0
          %s349 = smul.addr %s346, 4
          %s350 = scalar_lea.hbm %s6, %s349
          %s351 = sshll.u32 %s350, 4
          %s352 = int_to_ptr.hbm [resolvable:$true] %s351
          %s353 = sshll.u32 [#allocation13], 4
          %s354 = int_to_ptr.vmem [resolvable:$true] %s353
          %359 = dma.hbm_to_vmem [thread:$0]  %s352, 4096, %s354, [#allocation14], 64, 64, 4
        $region36: #{tpu_custom_call.1} parent=11 // pred_fallthru
          _
        // Predicated region
        $region37: #{tpu_custom_call.1} parent=11 // pred_check
          %p360 = pneg %p237
        $region38: #{tpu_custom_call.1} parent=11 // pred_check_branch
          %362 = sbr.rel (%p360) target = $region40
        $region39: #{tpu_custom_call.1} parent=11 // pred_region
          _
        $region40: #{tpu_custom_call.1} parent=11 // pred_fallthru
          _
      $region12: #{tpu_custom_call.1} parent=5 // pred_fallthru
        _
      %p363 = scmp.lt.s32.totalorder %s23, 2
      // Predicated region
      $region41: #{tpu_custom_call.1} parent=5 // pred_check
        %p364 = pneg %p363
      $region42: #{tpu_custom_call.1} parent=5 // pred_check_branch
        %366 = sbr.rel (%p364) target = $region44
      $region43: #{tpu_custom_call.1} parent=5 // pred_region
        // Predicated region
        $region45: #{tpu_custom_call.1} parent=43 // pred_check
          %p367 = pneg %p64
        $region46: #{tpu_custom_call.1} parent=43 // pred_check_branch
          %369 = sbr.rel (%p367) target = $region48
        $region47: #{tpu_custom_call.1} parent=43 // pred_region
          %s370 = sand.u32 %s54, 1
          %s371 = scalar_lea.sflag [#allocation5], %s370
          %s372 = sand.u32 %s54, 1
          %s373 = smul.addr %s372, 8
          %s374 = scalar_lea.vmem [#allocation4], %s373
          %376 = vsyncadd %s371, 0
          %s377 = sadd.s32 %s30, %s31
          %s378 = smul.addr %s377, 8
          %s379 = scalar_lea.hbm %s0, %s378
          %s381 = sshll.u32 %s379, 4
          %s382 = int_to_ptr.hbm [resolvable:$true] %s381
          %s383 = sshll.u32 %s374, 4
          %s384 = int_to_ptr.vmem [resolvable:$true] %s383
          %386 = dma.hbm_to_vmem [thread:$0]  %s382, 128, %s384, %s371
        $region48: #{tpu_custom_call.1} parent=43 // pred_fallthru
          _
      $region44: #{tpu_custom_call.1} parent=5 // pred_fallthru
        _
      %p387 = scmp.le.s32.totalorder 1, %s23
      %p388 = scmp.lt.s32.totalorder %s23, 3
      %p389 = pnand %p387, %p388
      %p390 = pneg %p389
      // Predicated region
      $region49: #{tpu_custom_call.1} parent=5 // pred_check
        _
      $region50: #{tpu_custom_call.1} parent=5 // pred_check_branch
        %392 = sbr.rel (%p389) target = $region52
      $region51: #{tpu_custom_call.1} parent=5 // pred_region
        %s393 = ssub.s32 %s23, 1
        %s394 = sand.u32 %s57, 1
        %s395 = scalar_lea.sflag [#allocation5], %s394
        %s396 = sand.u32 %s57, 1
        %s397 = smul.addr %s396, 8
        %s398 = scalar_lea.vmem [#allocation4], %s397
        // Predicated region
        $region53: #{tpu_custom_call.1} parent=51 // pred_check
          %p399 = pneg %p70
        $region54: #{tpu_custom_call.1} parent=51 // pred_check_branch
          %401 = sbr.rel (%p399) target = $region56
        $region55: #{tpu_custom_call.1} parent=51 // pred_region
          %403 = dma.done %s395, 128
        $region56: #{tpu_custom_call.1} parent=51 // pred_fallthru
          _
        // Predicated region
        $region57: #{tpu_custom_call.1} parent=51 // pred_check
          %p404 = pneg %p96
        $region58: #{tpu_custom_call.1} parent=51 // pred_check_branch
          %406 = sbr.rel (%p404) target = $region60
        $region59: #{tpu_custom_call.1} parent=51 // pred_region
          %408 = dma.done [#allocation8], 128
        $region60: #{tpu_custom_call.1} parent=51 // pred_fallthru
          _
        // Predicated region
        $region61: #{tpu_custom_call.1} parent=51 // pred_check
          %p409 = pneg %p117
        $region62: #{tpu_custom_call.1} parent=51 // pred_check_branch
          %411 = sbr.rel (%p409) target = $region64
        $region63: #{tpu_custom_call.1} parent=51 // pred_region
          %413 = dma.done [#allocation8], 16
        $region64: #{tpu_custom_call.1} parent=51 // pred_fallthru
          _
        // Predicated region
        $region65: #{tpu_custom_call.1} parent=51 // pred_check
          %p414 = pneg %p138
        $region66: #{tpu_custom_call.1} parent=51 // pred_check_branch
          %416 = sbr.rel (%p414) target = $region68
        $region67: #{tpu_custom_call.1} parent=51 // pred_region
          %418 = dma.done [#allocation11], 16
        $region68: #{tpu_custom_call.1} parent=51 // pred_fallthru
          _
        // Predicated region
        $region69: #{tpu_custom_call.1} parent=51 // pred_check
          %p419 = pneg %p164
        $region70: #{tpu_custom_call.1} parent=51 // pred_check_branch
          %421 = sbr.rel (%p419) target = $region72
        $region71: #{tpu_custom_call.1} parent=51 // pred_region
          %423 = dma.done [#allocation11], 4096
        $region72: #{tpu_custom_call.1} parent=51 // pred_fallthru
          _
        // Predicated region
        $region73: #{tpu_custom_call.1} parent=51 // pred_check
          %p424 = pneg %p216
        $region74: #{tpu_custom_call.1} parent=51 // pred_check_branch
          %426 = sbr.rel (%p424) target = $region76
        $region75: #{tpu_custom_call.1} parent=51 // pred_region
          %428 = dma.done [#allocation14], 4096
        $region76: #{tpu_custom_call.1} parent=51 // pred_fallthru
          _
        %s429 = sand.u32 %s57, 1
        %s430 = scalar_lea.sflag [#allocation5], %s429
        %s431 = sand.u32 %s57, 1
        %s432 = smul.addr %s431, 8
        %s433 = scalar_lea.vmem [#allocation4], %s432
        %p434 = pneg %p70
        %p435 = pneg %p67
        %p436 = pneg %p96
        %p437 = pneg %p93
        %p438 = pneg %p117
        %p439 = pneg %p114
        %p440 = pneg %p138
        %p441 = pneg %p135
        %p442 = pneg %p164
        %p443 = pneg %p161
        %s444 = smul.u32 4, %s35
        %p445 = scmp.lt.s32.totalorder %s444, 3
        %s446 = scalar_select %p445, %s444, 3
        %s447 = scalar_lea.vmem %s5, %s446
        %p448 = pneg %p190
        %p449 = pneg %p187
        %p450 = pneg %p216
        %p451 = pneg %p213
        %p452 = pneg %p237
        %p453 = pneg %p234
        %p454 = pneg %p265
        %p455 = pneg %p262
        %s456 = sand.u32 %s252, 1
        %s457 = scalar_lea.sflag [#allocation6], %s456
        %s458 = sand.u32 %s252, 1
        %s459 = smul.addr %s458, 8
        %s460 = scalar_lea.vmem [#allocation15], %s459
        %s461 = smul.u32 4, %s35
        %s462 = smul.u32 4, %s35
        %p463 = scmp.lt.s32.totalorder %s462, 3
        %s464 = scalar_select %p463, %s462, 3
        %s465 = scalar_lea.vmem %s5, %s464
        %s466 = smul.u32 4, %s35
        %s467 = smul.u32 64, %s35
        %p468 = scmp.eq.s32.totalorder %s35, 0
        // Predicated region
        $region77: #{tpu_custom_call.1} parent=51 // pred_check
          %p469 = pneg %p468
        $region78: #{tpu_custom_call.1} parent=51 // pred_check_branch
          %471 = sbr.rel (%p469) target = $region80
        $region79: #{tpu_custom_call.1} parent=51 // pred_region
          %v472 = vld [vmem:[%s398] sm:$0xff]
          %v473 = vld [vmem:[#allocation7] sm:$0xff]
          %v474 = vadd.f32 %v472, %v473
          %475 = vadd.xlane.f32.xlu0 %v474
          %v476 = vpop.xlane.xlu0 %475
          %v477 = vrcp.pop 128.0
          %v478 = vmul.f32 128.0, %v477
          %v479 = vsub.f32 1.0, %v478
          %v480 = vmul.f32 %v477, %v479
          %v481 = vadd.f32 %v477, %v480
          %vm482 = vweird.f32 %v477
          %v483 = vsel %vm482, %v477, %v481
          %v484 = vmul.f32 %v476, %v483
          %v485 = vsub.f32 %v474, %v484
          %v486 = vmul.f32 %v485, %v485
          %487 = vadd.xlane.f32.xlu0 %v486
          %v488 = vpop.xlane.xlu0 %487
          %v489 = vmul.f32 %v488, %v483
          %v490 = vadd.f32 %v489, 1e-05
          %v491 = vrsqrt.pop %v490
          %v492 = vmul.f32 %v491, %v490
          %v493 = vmul.f32 %v492, %v491
          %v494 = vmul.f32 0.5, %v493
          %v495 = vsub.f32 1.5, %v494
          %v496 = vmul.f32 %v491, %v495
          %vm497 = vweird.f32 %v490
          %vm498 = vweird.f32 %v491
          %vm499 = vmor %vm497, %vm498
          %v500 = vsel %vm499, %v491, %v496
          %v501 = vmul.f32 %v485, %v500
          %v502 = vld [vmem:[#allocation9] sm:$0x1]
          %v504 = vperm.slane %v502, 0
          %v506 = vmul.f32 %v501, %v504
          %v507 = vld [vmem:[#allocation10] sm:$0x1]
          %v509 = vperm.slane %v507, 0
          %v511 = vadd.f32 %v506, %v509
          %v512 = vpack.c.bf16 %v511, %v511
          %513 = vst [vmem:[#allocation2] sm:$0xf] %v512
          %514 = vst [vmem:[#allocation3] sm:$0xff] 0.0
        $region80: #{tpu_custom_call.1} parent=51 // pred_fallthru
          _
        %v515 = vld [vmem:[#allocation2] sm:$0xf]
        %v516 = vld [vmem:[#allocation12] sm:$0xff]
        %v517 = vld [vmem:[#allocation12 + $0x8] sm:$0xff]
        %v518 = vld [vmem:[#allocation12 + $0x10] sm:$0xff]
        %v519 = vld [vmem:[#allocation12 + $0x18] sm:$0xff]
        %v520 = vld [vmem:[#allocation12 + $0x20] sm:$0xff]
        %v521 = vld [vmem:[#allocation12 + $0x28] sm:$0xff]
        %v522 = vld [vmem:[#allocation12 + $0x30] sm:$0xff]
        %v523 = vld [vmem:[#allocation12 + $0x38] sm:$0xff]
        %v524 = vld [vmem:[#allocation12 + $0x40] sm:$0xff]
        %v525 = vld [vmem:[#allocation12 + $0x48] sm:$0xff]
        %v526 = vld [vmem:[#allocation12 + $0x50] sm:$0xff]
        %v527 = vld [vmem:[#allocation12 + $0x58] sm:$0xff]
        %v528 = vld [vmem:[#allocation12 + $0x60] sm:$0xff]
        %v529 = vld [vmem:[#allocation12 + $0x68] sm:$0xff]
        %v530 = vld [vmem:[#allocation12 + $0x70] sm:$0xff]
        %v531 = vld [vmem:[#allocation12 + $0x78] sm:$0xff]
        %v532 = vld [vmem:[#allocation12 + $0x80] sm:$0xff]
        %v533 = vld [vmem:[#allocation12 + $0x88] sm:$0xff]
        %v534 = vld [vmem:[#allocation12 + $0x90] sm:$0xff]
        %v535 = vld [vmem:[#allocation12 + $0x98] sm:$0xff]
        %v536 = vld [vmem:[#allocation12 + $0xa0] sm:$0xff]
        %v537 = vld [vmem:[#allocation12 + $0xa8] sm:$0xff]
        %v538 = vld [vmem:[#allocation12 + $0xb0] sm:$0xff]
        %v539 = vld [vmem:[#allocation12 + $0xb8] sm:$0xff]
        %v540 = vld [vmem:[#allocation12 + $0xc0] sm:$0xff]
        %v541 = vld [vmem:[#allocation12 + $0xc8] sm:$0xff]
        %v542 = vld [vmem:[#allocation12 + $0xd0] sm:$0xff]
        %v543 = vld [vmem:[#allocation12 + $0xd8] sm:$0xff]
        %v544 = vld [vmem:[#allocation12 + $0xe0] sm:$0xff]
        %v545 = vld [vmem:[#allocation12 + $0xe8] sm:$0xff]
        %v546 = vld [vmem:[#allocation12 + $0xf0] sm:$0xff]
        %v547 = vld [vmem:[#allocation12 + $0xf8] sm:$0xff]
        %v548 = vld [vmem:[%s465] sm:$0xf]
        %v550 = vperm.slane %v548, 0
        %v551 = vperm.slane %v548, 1
        %v552 = vperm.slane %v548, 2
        %v553 = vperm.slane %v548, 3
        %v590 = vunpack.c.l.b16 %v516
        %v591 = vunpack.c.h.b16 %v516
        %v592 = vunpack.c.l.b16 %v517
        %v593 = vunpack.c.h.b16 %v517
        %v594 = vunpack.c.l.b16 %v518
        %v595 = vunpack.c.h.b16 %v518
        %v596 = vunpack.c.l.b16 %v519
        %v597 = vunpack.c.h.b16 %v519
        %v598 = vunpack.c.l.b16 %v520
        %v599 = vunpack.c.h.b16 %v520
        %v600 = vunpack.c.l.b16 %v521
        %v601 = vunpack.c.h.b16 %v521
        %v602 = vunpack.c.l.b16 %v522
        %v603 = vunpack.c.h.b16 %v522
        %v604 = vunpack.c.l.b16 %v523
        %v605 = vunpack.c.h.b16 %v523
        %v606 = vunpack.c.l.b16 %v524
        %v607 = vunpack.c.h.b16 %v524
        %v608 = vunpack.c.l.b16 %v525
        %v609 = vunpack.c.h.b16 %v525
        %v610 = vunpack.c.l.b16 %v526
        %v611 = vunpack.c.h.b16 %v526
        %v612 = vunpack.c.l.b16 %v527
        %v613 = vunpack.c.h.b16 %v527
        %v614 = vunpack.c.l.b16 %v528
        %v615 = vunpack.c.h.b16 %v528
        %v616 = vunpack.c.l.b16 %v529
        %v617 = vunpack.c.h.b16 %v529
        %v618 = vunpack.c.l.b16 %v530
        %v619 = vunpack.c.h.b16 %v530
        %v620 = vunpack.c.l.b16 %v531
        %v621 = vunpack.c.h.b16 %v531
        %v622 = vunpack.c.l.b16 %v532
        %v623 = vunpack.c.h.b16 %v532
        %v624 = vunpack.c.l.b16 %v533
        %v625 = vunpack.c.h.b16 %v533
        %v626 = vunpack.c.l.b16 %v534
        %v627 = vunpack.c.h.b16 %v534
        %v628 = vunpack.c.l.b16 %v535
        %v629 = vunpack.c.h.b16 %v535
        %v630 = vunpack.c.l.b16 %v536
        %v631 = vunpack.c.h.b16 %v536
        %v632 = vunpack.c.l.b16 %v537
        %v633 = vunpack.c.h.b16 %v537
        %v634 = vunpack.c.l.b16 %v538
        %v635 = vunpack.c.h.b16 %v538
        %v636 = vunpack.c.l.b16 %v539
        %v637 = vunpack.c.h.b16 %v539
        %v638 = vunpack.c.l.b16 %v540
        %v639 = vunpack.c.h.b16 %v540
        %v640 = vunpack.c.l.b16 %v541
        %v641 = vunpack.c.h.b16 %v541
        %v642 = vunpack.c.l.b16 %v542
        %v643 = vunpack.c.h.b16 %v542
        %v644 = vunpack.c.l.b16 %v543
        %v645 = vunpack.c.h.b16 %v543
        %v646 = vunpack.c.l.b16 %v544
        %v647 = vunpack.c.h.b16 %v544
        %v648 = vunpack.c.l.b16 %v545
        %v649 = vunpack.c.h.b16 %v545
        %v650 = vunpack.c.l.b16 %v546
        %v651 = vunpack.c.h.b16 %v546
        %v652 = vunpack.c.l.b16 %v547
        %v653 = vunpack.c.h.b16 %v547
        %v654 = vpack.c.b16 %v594, %v590
        %v655 = vpack.c.b16 %v595, %v591
        %v656 = vpack.c.b16 %v596, %v592
        %v657 = vpack.c.b16 %v597, %v593
        %v658 = vpack.c.b16 %v602, %v598
        %v659 = vpack.c.b16 %v603, %v599
        %v660 = vpack.c.b16 %v604, %v600
        %v661 = vpack.c.b16 %v605, %v601
        %v662 = vpack.c.b16 %v610, %v606
        %v663 = vpack.c.b16 %v611, %v607
        %v664 = vpack.c.b16 %v612, %v608
        %v665 = vpack.c.b16 %v613, %v609
        %v666 = vpack.c.b16 %v618, %v614
        %v667 = vpack.c.b16 %v619, %v615
        %v668 = vpack.c.b16 %v620, %v616
        %v669 = vpack.c.b16 %v621, %v617
        %v670 = vpack.c.b16 %v626, %v622
        %v671 = vpack.c.b16 %v627, %v623
        %v672 = vpack.c.b16 %v628, %v624
        %v673 = vpack.c.b16 %v629, %v625
        %v674 = vpack.c.b16 %v634, %v630
        %v675 = vpack.c.b16 %v635, %v631
        %v676 = vpack.c.b16 %v636, %v632
        %v677 = vpack.c.b16 %v637, %v633
        %v678 = vpack.c.b16 %v642, %v638
        %v679 = vpack.c.b16 %v643, %v639
        %v680 = vpack.c.b16 %v644, %v640
        %v681 = vpack.c.b16 %v645, %v641
        %v682 = vpack.c.b16 %v650, %v646
        %v683 = vpack.c.b16 %v651, %v647
        %v684 = vpack.c.b16 %v652, %v648
        %v685 = vpack.c.b16 %v653, %v649
        %718 = vmatpush.bf16.msra.mxu0 %v682
        %719 = vmatpush.bf16.msra.mxu0 %v678
        %720 = vmatpush.bf16.msra.mxu0 %v674
        %721 = vmatpush.bf16.msra.mxu0 %v670
        %722 = vmatpush.bf16.msra.mxu0 %v666
        %723 = vmatpush.bf16.msra.mxu0 %v662
        %724 = vmatpush.bf16.msra.mxu0 %v658
        %725 = vmatpush.bf16.msra.mxu0 %v654
        %726 = vmatmul.bf16.gmra.mxu0 %v515
        %v727 = vpop.f32.mrf.mxu0
        %v728 = vadd.f32 %v550, %v727
        %v729 = vpop.f32.mrf.mxu0
        %730 = vdwg.mxu0
        %731 = vmatpush.bf16.msra.mxu0 %v683
        %732 = vmatpush.bf16.msra.mxu0 %v679
        %733 = vmatpush.bf16.msra.mxu0 %v675
        %734 = vmatpush.bf16.msra.mxu0 %v671
        %735 = vmatpush.bf16.msra.mxu0 %v667
        %736 = vmatpush.bf16.msra.mxu0 %v663
        %737 = vmatpush.bf16.msra.mxu0 %v659
        %738 = vmatpush.bf16.msra.mxu0 %v655
        %739 = vmatmul.bf16.gmra.mxu0 %v515
        %v740 = vpop.f32.mrf.mxu0
        %v741 = vadd.f32 %v551, %v740
        %v742 = vpop.f32.mrf.mxu0
        %743 = vdwg.mxu0
        %744 = vmatpush.bf16.msra.mxu0 %v684
        %745 = vmatpush.bf16.msra.mxu0 %v680
        %746 = vmatpush.bf16.msra.mxu0 %v676
        %747 = vmatpush.bf16.msra.mxu0 %v672
        %748 = vmatpush.bf16.msra.mxu0 %v668
        %749 = vmatpush.bf16.msra.mxu0 %v664
        %750 = vmatpush.bf16.msra.mxu0 %v660
        %751 = vmatpush.bf16.msra.mxu0 %v656
        %752 = vmatmul.bf16.gmra.mxu0 %v515
        %v753 = vpop.f32.mrf.mxu0
        %v754 = vadd.f32 %v552, %v753
        %v755 = vpop.f32.mrf.mxu0
        %756 = vdwg.mxu0
        %757 = vmatpush.bf16.msra.mxu0 %v685
        %758 = vmatpush.bf16.msra.mxu0 %v681
        %759 = vmatpush.bf16.msra.mxu0 %v677
        %760 = vmatpush.bf16.msra.mxu0 %v673
        %761 = vmatpush.bf16.msra.mxu0 %v669
        %762 = vmatpush.bf16.msra.mxu0 %v665
        %763 = vmatpush.bf16.msra.mxu0 %v661
        %764 = vmatpush.bf16.msra.mxu0 %v657
        %765 = vmatmul.bf16.gmra.mxu0 %v515
        %v766 = vpop.f32.mrf.mxu0
        %v767 = vadd.f32 %v553, %v766
        %v768 = vpop.f32.mrf.mxu0
        %769 = vdwg.mxu0
        %v770 = vmul.f32 %v728, %v728
        %v771 = vmul.f32 %v741, %v741
        %v772 = vmul.f32 %v754, %v754
        %v773 = vmul.f32 %v767, %v767
        %v774 = vmul.f32 %v728, %v770
        %v775 = vmul.f32 %v741, %v771
        %v776 = vmul.f32 %v754, %v772
        %v777 = vmul.f32 %v767, %v773
        %v778 = vmul.f32 %v774, 0.044715
        %v779 = vmul.f32 %v775, 0.044715
        %v780 = vmul.f32 %v776, 0.044715
        %v781 = vmul.f32 %v777, 0.044715
        %v782 = vadd.f32 %v728, %v778
        %v783 = vadd.f32 %v741, %v779
        %v784 = vadd.f32 %v754, %v780
        %v785 = vadd.f32 %v767, %v781
        %v786 = vmul.f32 %v782, 0.7978846
        %v787 = vmul.f32 %v783, 0.7978846
        %v788 = vmul.f32 %v784, 0.7978846
        %v789 = vmul.f32 %v785, 0.7978846
        %v790 = vtanh.pop %v786
        %v791 = vtanh.pop %v787
        %v792 = vtanh.pop %v788
        %v793 = vtanh.pop %v789
        %v794 = vadd.f32 %v790, 1.0
        %v795 = vadd.f32 %v791, 1.0
        %v796 = vadd.f32 %v792, 1.0
        %v797 = vadd.f32 %v793, 1.0
        %v798 = vmul.f32 %v794, 0.5
        %v799 = vmul.f32 %v795, 0.5
        %v800 = vmul.f32 %v796, 0.5
        %v801 = vmul.f32 %v797, 0.5
        %v802 = vmul.f32 %v728, %v798
        %v803 = vmul.f32 %v741, %v799
        %v804 = vmul.f32 %v754, %v800
        %v805 = vmul.f32 %v767, %v801
        %v806 = vld [vmem:[#allocation3] sm:$0xff]
        %v807 = vpack.c.bf16 %v802, %v802
        %v808 = vpack.c.bf16 %v803, %v803
        %v809 = vpack.c.bf16 %v804, %v804
        %v810 = vpack.c.bf16 %v805, %v805
        %v811 = vld [vmem:[#allocation13] sm:$0xf]
        %v812 = vld [vmem:[#allocation13 + $0x4] sm:$0xf]
        %v813 = vld [vmem:[#allocation13 + $0x8] sm:$0xf]
        %v814 = vld [vmem:[#allocation13 + $0xc] sm:$0xf]
        %v815 = vld [vmem:[#allocation13 + $0x10] sm:$0xf]
        %v816 = vld [vmem:[#allocation13 + $0x14] sm:$0xf]
        %v817 = vld [vmem:[#allocation13 + $0x18] sm:$0xf]
        %v818 = vld [vmem:[#allocation13 + $0x1c] sm:$0xf]
        %v819 = vld [vmem:[#allocation13 + $0x20] sm:$0xf]
        %v820 = vld [vmem:[#allocation13 + $0x24] sm:$0xf]
        %v821 = vld [vmem:[#allocation13 + $0x28] sm:$0xf]
        %v822 = vld [vmem:[#allocation13 + $0x2c] sm:$0xf]
        %v823 = vld [vmem:[#allocation13 + $0x30] sm:$0xf]
        %v824 = vld [vmem:[#allocation13 + $0x34] sm:$0xf]
        %v825 = vld [vmem:[#allocation13 + $0x38] sm:$0xf]
        %v826 = vld [vmem:[#allocation13 + $0x3c] sm:$0xf]
        %v827 = vld [vmem:[#allocation13 + $0x40] sm:$0xf]
        %v828 = vld [vmem:[#allocation13 + $0x44] sm:$0xf]
        %v829 = vld [vmem:[#allocation13 + $0x48] sm:$0xf]
        %v830 = vld [vmem:[#allocation13 + $0x4c] sm:$0xf]
        %v831 = vld [vmem:[#allocation13 + $0x50] sm:$0xf]
        %v832 = vld [vmem:[#allocation13 + $0x54] sm:$0xf]
        %v833 = vld [vmem:[#allocation13 + $0x58] sm:$0xf]
        %v834 = vld [vmem:[#allocation13 + $0x5c] sm:$0xf]
        %v835 = vld [vmem:[#allocation13 + $0x60] sm:$0xf]
        %v836 = vld [vmem:[#allocation13 + $0x64] sm:$0xf]
        %v837 = vld [vmem:[#allocation13 + $0x68] sm:$0xf]
        %v838 = vld [vmem:[#allocation13 + $0x6c] sm:$0xf]
        %v839 = vld [vmem:[#allocation13 + $0x70] sm:$0xf]
        %v840 = vld [vmem:[#allocation13 + $0x74] sm:$0xf]
        %v841 = vld [vmem:[#allocation13 + $0x78] sm:$0xf]
        %v842 = vld [vmem:[#allocation13 + $0x7c] sm:$0xf]
        %v843 = vld [vmem:[#allocation13 + $0x80] sm:$0xf]
        %v844 = vld [vmem:[#allocation13 + $0x84] sm:$0xf]
        %v845 = vld [vmem:[#allocation13 + $0x88] sm:$0xf]
        %v846 = vld [vmem:[#allocation13 + $0x8c] sm:$0xf]
        %v847 = vld [vmem:[#allocation13 + $0x90] sm:$0xf]
        %v848 = vld [vmem:[#allocation13 + $0x94] sm:$0xf]
        %v849 = vld [vmem:[#allocation13 + $0x98] sm:$0xf]
        %v850 = vld [vmem:[#allocation13 + $0x9c] sm:$0xf]
        %v851 = vld [vmem:[#allocation13 + $0xa0] sm:$0xf]
        %v852 = vld [vmem:[#allocation13 + $0xa4] sm:$0xf]
        %v853 = vld [vmem:[#allocation13 + $0xa8] sm:$0xf]
        %v854 = vld [vmem:[#allocation13 + $0xac] sm:$0xf]
        %v855 = vld [vmem:[#allocation13 + $0xb0] sm:$0xf]
        %v856 = vld [vmem:[#allocation13 + $0xb4] sm:$0xf]
        %v857 = vld [vmem:[#allocation13 + $0xb8] sm:$0xf]
        %v858 = vld [vmem:[#allocation13 + $0xbc] sm:$0xf]
        %v859 = vld [vmem:[#allocation13 + $0xc0] sm:$0xf]
        %v860 = vld [vmem:[#allocation13 + $0xc4] sm:$0xf]
        %v861 = vld [vmem:[#allocation13 + $0xc8] sm:$0xf]
        %v862 = vld [vmem:[#allocation13 + $0xcc] sm:$0xf]
        %v863 = vld [vmem:[#allocation13 + $0xd0] sm:$0xf]
        %v864 = vld [vmem:[#allocation13 + $0xd4] sm:$0xf]
        %v865 = vld [vmem:[#allocation13 + $0xd8] sm:$0xf]
        %v866 = vld [vmem:[#allocation13 + $0xdc] sm:$0xf]
        %v867 = vld [vmem:[#allocation13 + $0xe0] sm:$0xf]
        %v868 = vld [vmem:[#allocation13 + $0xe4] sm:$0xf]
        %v869 = vld [vmem:[#allocation13 + $0xe8] sm:$0xf]
        %v870 = vld [vmem:[#allocation13 + $0xec] sm:$0xf]
        %v871 = vld [vmem:[#allocation13 + $0xf0] sm:$0xf]
        %v872 = vld [vmem:[#allocation13 + $0xf4] sm:$0xf]
        %v873 = vld [vmem:[#allocation13 + $0xf8] sm:$0xf]
        %v874 = vld [vmem:[#allocation13 + $0xfc] sm:$0xf]
        %v939 = vunpack.c.l.b16 %v811
        %v940 = vunpack.c.l.b16 %v812
        %v941 = vunpack.c.l.b16 %v813
        %v942 = vunpack.c.l.b16 %v814
        %v943 = vunpack.c.l.b16 %v815
        %v944 = vunpack.c.l.b16 %v816
        %v945 = vunpack.c.l.b16 %v817
        %v946 = vunpack.c.l.b16 %v818
        %v947 = vunpack.c.l.b16 %v819
        %v948 = vunpack.c.l.b16 %v820
        %v949 = vunpack.c.l.b16 %v821
        %v950 = vunpack.c.l.b16 %v822
        %v951 = vunpack.c.l.b16 %v823
        %v952 = vunpack.c.l.b16 %v824
        %v953 = vunpack.c.l.b16 %v825
        %v954 = vunpack.c.l.b16 %v826
        %v955 = vunpack.c.l.b16 %v827
        %v956 = vunpack.c.l.b16 %v828
        %v957 = vunpack.c.l.b16 %v829
        %v958 = vunpack.c.l.b16 %v830
        %v959 = vunpack.c.l.b16 %v831
        %v960 = vunpack.c.l.b16 %v832
        %v961 = vunpack.c.l.b16 %v833
        %v962 = vunpack.c.l.b16 %v834
        %v963 = vunpack.c.l.b16 %v835
        %v964 = vunpack.c.l.b16 %v836
        %v965 = vunpack.c.l.b16 %v837
        %v966 = vunpack.c.l.b16 %v838
        %v967 = vunpack.c.l.b16 %v839
        %v968 = vunpack.c.l.b16 %v840
        %v969 = vunpack.c.l.b16 %v841
        %v970 = vunpack.c.l.b16 %v842
        %v971 = vunpack.c.l.b16 %v843
        %v972 = vunpack.c.l.b16 %v844
        %v973 = vunpack.c.l.b16 %v845
        %v974 = vunpack.c.l.b16 %v846
        %v975 = vunpack.c.l.b16 %v847
        %v976 = vunpack.c.l.b16 %v848
        %v977 = vunpack.c.l.b16 %v849
        %v978 = vunpack.c.l.b16 %v850
        %v979 = vunpack.c.l.b16 %v851
        %v980 = vunpack.c.l.b16 %v852
        %v981 = vunpack.c.l.b16 %v853
        %v982 = vunpack.c.l.b16 %v854
        %v983 = vunpack.c.l.b16 %v855
        %v984 = vunpack.c.l.b16 %v856
        %v985 = vunpack.c.l.b16 %v857
        %v986 = vunpack.c.l.b16 %v858
        %v987 = vunpack.c.l.b16 %v859
        %v988 = vunpack.c.l.b16 %v860
        %v989 = vunpack.c.l.b16 %v861
        %v990 = vunpack.c.l.b16 %v862
        %v991 = vunpack.c.l.b16 %v863
        %v992 = vunpack.c.l.b16 %v864
        %v993 = vunpack.c.l.b16 %v865
        %v994 = vunpack.c.l.b16 %v866
        %v995 = vunpack.c.l.b16 %v867
        %v996 = vunpack.c.l.b16 %v868
        %v997 = vunpack.c.l.b16 %v869
        %v998 = vunpack.c.l.b16 %v870
        %v999 = vunpack.c.l.b16 %v871
        %v1000 = vunpack.c.l.b16 %v872
        %v1001 = vunpack.c.l.b16 %v873
        %v1002 = vunpack.c.l.b16 %v874
        %v1003 = vpack.c.b16 %v940, %v939
        %v1004 = vpack.c.b16 %v942, %v941
        %v1005 = vpack.c.b16 %v944, %v943
        %v1006 = vpack.c.b16 %v946, %v945
        %v1007 = vpack.c.b16 %v948, %v947
        %v1008 = vpack.c.b16 %v950, %v949
        %v1009 = vpack.c.b16 %v952, %v951
        %v1010 = vpack.c.b16 %v954, %v953
        %v1011 = vpack.c.b16 %v956, %v955
        %v1012 = vpack.c.b16 %v958, %v957
        %v1013 = vpack.c.b16 %v960, %v959
        %v1014 = vpack.c.b16 %v962, %v961
        %v1015 = vpack.c.b16 %v964, %v963
        %v1016 = vpack.c.b16 %v966, %v965
        %v1017 = vpack.c.b16 %v968, %v967
        %v1018 = vpack.c.b16 %v970, %v969
        %v1019 = vpack.c.b16 %v972, %v971
        %v1020 = vpack.c.b16 %v974, %v973
        %v1021 = vpack.c.b16 %v976, %v975
        %v1022 = vpack.c.b16 %v978, %v977
        %v1023 = vpack.c.b16 %v980, %v979
        %v1024 = vpack.c.b16 %v982, %v981
        %v1025 = vpack.c.b16 %v984, %v983
        %v1026 = vpack.c.b16 %v986, %v985
        %v1027 = vpack.c.b16 %v988, %v987
        %v1028 = vpack.c.b16 %v990, %v989
        %v1029 = vpack.c.b16 %v992, %v991
        %v1030 = vpack.c.b16 %v994, %v993
        %v1031 = vpack.c.b16 %v996, %v995
        %v1032 = vpack.c.b16 %v998, %v997
        %v1033 = vpack.c.b16 %v1000, %v999
        %v1034 = vpack.c.b16 %v1002, %v1001
        %1067 = vmatpush.bf16.msra.mxu0 %v1010
        %1068 = vmatpush.bf16.msra.mxu0 %v1009
        %1069 = vmatpush.bf16.msra.mxu0 %v1008
        %1070 = vmatpush.bf16.msra.mxu0 %v1007
        %1071 = vmatpush.bf16.msra.mxu0 %v1006
        %1072 = vmatpush.bf16.msra.mxu0 %v1005
        %1073 = vmatpush.bf16.msra.mxu0 %v1004
        %1074 = vmatpush.bf16.msra.mxu0 %v1003
        %1075 = vmatmul.bf16.gmra.mxu0 %v807
        %v1076 = vpop.f32.mrf.mxu0
        %v1077 = vadd.f32 0.0, %v1076
        %v1078 = vpop.f32.mrf.mxu0
        %1079 = vdwg.mxu0
        %1080 = vmatpush.bf16.msra.mxu0 %v1018
        %1081 = vmatpush.bf16.msra.mxu0 %v1017
        %1082 = vmatpush.bf16.msra.mxu0 %v1016
        %1083 = vmatpush.bf16.msra.mxu0 %v1015
        %1084 = vmatpush.bf16.msra.mxu0 %v1014
        %1085 = vmatpush.bf16.msra.mxu0 %v1013
        %1086 = vmatpush.bf16.msra.mxu0 %v1012
        %1087 = vmatpush.bf16.msra.mxu0 %v1011
        %1088 = vmatmul.bf16.gmra.mxu0 %v808
        %v1089 = vpop.f32.mrf.mxu0
        %v1090 = vadd.f32 %v1077, %v1089
        %v1091 = vpop.f32.mrf.mxu0
        %1092 = vdwg.mxu0
        %1093 = vmatpush.bf16.msra.mxu0 %v1026
        %1094 = vmatpush.bf16.msra.mxu0 %v1025
        %1095 = vmatpush.bf16.msra.mxu0 %v1024
        %1096 = vmatpush.bf16.msra.mxu0 %v1023
        %1097 = vmatpush.bf16.msra.mxu0 %v1022
        %1098 = vmatpush.bf16.msra.mxu0 %v1021
        %1099 = vmatpush.bf16.msra.mxu0 %v1020
        %1100 = vmatpush.bf16.msra.mxu0 %v1019
        %1101 = vmatmul.bf16.gmra.mxu0 %v809
        %v1102 = vpop.f32.mrf.mxu0
        %v1103 = vadd.f32 %v1090, %v1102
        %v1104 = vpop.f32.mrf.mxu0
        %1105 = vdwg.mxu0
        %1106 = vmatpush.bf16.msra.mxu0 %v1034
        %1107 = vmatpush.bf16.msra.mxu0 %v1033
        %1108 = vmatpush.bf16.msra.mxu0 %v1032
        %1109 = vmatpush.bf16.msra.mxu0 %v1031
        %1110 = vmatpush.bf16.msra.mxu0 %v1030
        %1111 = vmatpush.bf16.msra.mxu0 %v1029
        %1112 = vmatpush.bf16.msra.mxu0 %v1028
        %1113 = vmatpush.bf16.msra.mxu0 %v1027
        %1114 = vmatmul.bf16.gmra.mxu0 %v810
        %v1115 = vpop.f32.mrf.mxu0
        %v1116 = vadd.f32 %v1103, %v1115
        %v1117 = vpop.f32.mrf.mxu0
        %1118 = vdwg.mxu0
        %v1119 = vadd.f32 %v806, %v1116
        %1120 = vst [vmem:[#allocation3] sm:$0xff] %v1119
        // Predicated region
        $region81: #{tpu_custom_call.1} parent=51 // pred_check
          %p1121 = pneg %p468
        $region82: #{tpu_custom_call.1} parent=51 // pred_check_branch
          %1123 = sbr.rel (%p1121) target = $region84
        $region83: #{tpu_custom_call.1} parent=51 // pred_region
          %v1124 = vld [vmem:[%s398] sm:$0xff]
          %v1125 = vld [vmem:[#allocation3] sm:$0xff]
          %v1126 = vadd.f32 %v1124, %v1125
          %v1127 = vld [vmem:[%s7] sm:$0x1]
          %v1129 = vperm.slane %v1127, 0
          %v1131 = vadd.f32 %v1126, %v1129
          %1132 = vst [vmem:[%s460] sm:$0xff] %v1131
        $region84: #{tpu_custom_call.1} parent=51 // pred_fallthru
          _
        %s1133 = sand.u32 %s252, 1
        %s1134 = scalar_lea.sflag [#allocation6], %s1133
        %s1135 = sand.u32 %s252, 1
        %s1136 = smul.addr %s1135, 8
        %s1137 = scalar_lea.vmem [#allocation15], %s1136
        // Predicated region
        $region85: #{tpu_custom_call.1} parent=51 // pred_check
          %p1138 = pneg %p262
        $region86: #{tpu_custom_call.1} parent=51 // pred_check_branch
          %1140 = sbr.rel (%p1138) target = $region88
        $region87: #{tpu_custom_call.1} parent=51 // pred_region
          %1142 = vsyncadd %s1134, 0
          %s1143 = sadd.s32 %s33, %s34
          %s1144 = smul.addr %s1143, 8
          %s1145 = scalar_lea.hbm %s8, %s1144
          %s1147 = sshll.u32 %s1137, 4
          %s1148 = int_to_ptr.vmem [resolvable:$true] %s1147
          %s1149 = sshll.u32 %s1145, 4
          %s1150 = int_to_ptr.hbm [resolvable:$true] %s1149
          %1152 = dma.vmem_to_hbm [thread:$0]  %s1148, 128, %s1150, %s1134
        $region88: #{tpu_custom_call.1} parent=51 // pred_fallthru
          _
      $region52: #{tpu_custom_call.1} parent=5 // pred_fallthru
        _
      %p1153 = scmp.le.s32.totalorder 2, %s23
      // Predicated region
      $region89: #{tpu_custom_call.1} parent=5 // pred_check
        %p1154 = pneg %p1153
      $region90: #{tpu_custom_call.1} parent=5 // pred_check_branch
        %1156 = sbr.rel (%p1154) target = $region92
      $region91: #{tpu_custom_call.1} parent=5 // pred_region
        %s1157 = ssub.s32 %s23, 2
        // Predicated region
        $region93: #{tpu_custom_call.1} parent=91 // pred_check
          %p1158 = pneg %p268
        $region94: #{tpu_custom_call.1} parent=91 // pred_check_branch
          %1160 = sbr.rel (%p1158) target = $region96
        $region95: #{tpu_custom_call.1} parent=91 // pred_region
          %s1161 = sand.u32 %s253, 1
          %s1162 = scalar_lea.sflag [#allocation6], %s1161
          %s1163 = sand.u32 %s253, 1
          %s1164 = smul.addr %s1163, 8
          %s1165 = scalar_lea.vmem [#allocation15], %s1164
          %1167 = dma.done %s1162, 128
        $region96: #{tpu_custom_call.1} parent=91 // pred_fallthru
          _
      $region92: #{tpu_custom_call.1} parent=5 // pred_fallthru
        _
    $region6: #{tpu_custom_call.1} parent=1 // loop_footer
      %s27 = sadd.s32 1, %s23
    $region7: #{tpu_custom_call.1} parent=1 // loop_footer_branch
      %22 = sbr.rel target = $region3
    $region8: #{tpu_custom_call.1} parent=1 // loop_exit
      _
    %1168 = vsyncpa [#allocation5], 1
    %s1169 = scalar_lea.sflag [#allocation5], 1
    %1170 = vsyncpa %s1169, 1
    %1171 = vsyncpa [#allocation8], 1
    %1172 = vsyncpa [#allocation11], 1
    %1173 = vsyncpa [#allocation14], 1
    %1174 = vsyncpa [#allocation6], 1
    %s1175 = scalar_lea.sflag [#allocation6], 1
    %1176 = vsyncpa %s1175, 1

</llo_original>
